<compile_context>
chip_gen: v7x
topology: tpu7x:2x2x1
jax: 0.10.0
libtpu: 0.0.40
codegen_flags: <defaults>
</compile_context>

<pallas_src>
import functools

import jax
import jax.numpy as jnp
from jax import lax
from jax.experimental import pallas as pl
from jax.experimental.pallas import tpu as pltpu

EPS = 1e-5
_LANE = 128                             # TPU lane width (last-dim tile)
_SUBLANE_F32 = 8                        # f32 sublane tile
_STORE_CONV_BUDGET = 8 * 1024 * 1024    # persist conv output in VMEM if <= this
_TILE_VMEM_BUDGET = 8 * 1024 * 1024     # streamed per-tile working-set target
_MAX_PLAIN_LANES = 32768                # un-pooled layers: big tiles amortise step cost
_MAX_POOL_LANES = 1024                  # pooled layer: selection matrix is (T, T/p)
_VMEM_LIMIT_BYTES = 48 * 1024 * 1024    # explicit scoped-VMEM limit (v7x-safe)


# -----------------------------------------------------------------------------
# Kernel
# -----------------------------------------------------------------------------
def _layer_kernel(*refs, tile_nl, pool_size, pool_type, inv_count,
                  store_conv, single_tile):
    """Conv1d(k=3,p=1) + BatchNorm1d(train) + ReLU (+ fused pooling).

    Grid = (phase, batch-tile):
      phase 0: im2col conv, accumulate per-channel sum / sum-of-squares,
               (optionally) persist the conv output in VMEM scratch.
      phase 1: read the conv output back (or recompute it), normalise with the
               finished batch stats, gamma/beta, ReLU, (pool), store once.
    """
    it = iter(refs)
    x_ref = next(it)                 # (Cin, TB)  lane-flattened activations
    w_ref = next(it)                 # (Cout, 3*Cin) tap-stacked weight
    gamma_ref = next(it)             # (Cout, 1)
    beta_ref = next(it)              # (Cout, 1)
    keepf_ref = next(it)             # (1, TB) 0 at the first pos of each sample
    keepl_ref = next(it)             # (1, TB) 0 at the last pos of each sample
    smat_ref = next(it) if pool_type is not None else None   # (TB, TB_out)
    o_ref = next(it)
    sum_ref = next(it)               # (Cout, 1) running sum(y)
    sq_ref = next(it)                # (Cout, 1) running sum(y*y)
    im_ref = next(it)                # (3*Cin, TB) im2col staging buffer
    conv_ref = next(it) if store_conv else None   # (Cout, total_nl) conv cache

    phase = pl.program_id(0)
    tile = pl.program_id(1)
    cin = x_ref.shape[0]
    tb = tile_nl

    def conv_store(y):
        if single_tile:
            conv_ref[...] = y
        else:
            # Multi-tile mode guarantees tile_nl % 128 == 0 (picker invariant).
            off = pl.multiple_of(tile * tile_nl, _LANE)
            conv_ref[:, pl.ds(off, tile_nl)] = y

    def conv_load():
        if single_tile:
            return conv_ref[...]
        off = pl.multiple_of(tile * tile_nl, _LANE)
        return conv_ref[:, pl.ds(off, tile_nl)]

    def conv_tile():
        x = x_ref[...]
        # im2col on the input: +-1 taps realigned along lanes with XLU rolls;
        # the host-precomputed keep masks implement the per-sample zero
        # padding (sample boundaries sit at multiples of seq_len inside the
        # lane-flattened tile).  One MXU matmul, contraction dim = 3*Cin.
        im_ref[0:cin, :] = pltpu.roll(x, shift=1, axis=1) * keepf_ref[...]
        im_ref[cin:2 * cin, :] = x
        im_ref[2 * cin:3 * cin, :] = (
            pltpu.roll(x, shift=tb - 1, axis=1) * keepl_ref[...])
        return jnp.dot(w_ref[...], im_ref[...],
                       preferred_element_type=jnp.float32)        # (Cout, TB)

    @pl.when((phase == 0) & (tile == 0))
    def _init_stats():
        sum_ref[...] = jnp.zeros_like(sum_ref)
        sq_ref[...] = jnp.zeros_like(sq_ref)

    @pl.when(phase == 0)
    def _stats_pass():
        y = conv_tile()
        # TODO(synk): accumulate around a per-channel shift (or add a third
        # sweep of sum((y-mean)^2)) if E[y^2]-E[y]^2 cancellation ever matters.
        sum_ref[...] += jnp.sum(y, axis=1, keepdims=True)
        sq_ref[...] += jnp.sum(y * y, axis=1, keepdims=True)
        if store_conv:
            conv_store(y)

    @pl.when(phase == 1)
    def _normalize_pass():
        y = conv_load() if store_conv else conv_tile()
        mean = sum_ref[...] * inv_count
        var = jnp.maximum(sq_ref[...] * inv_count - mean * mean, 0.0)
        scale = gamma_ref[...] * lax.rsqrt(var + EPS)
        shift = beta_ref[...] - mean * scale
        act = jnp.maximum(y * scale + shift, 0.0)                 # BN affine + ReLU

        if pool_type is not None:
            p = pool_size
            need_avg = pool_type in ("avg", "avg+max")
            need_max = pool_type in ("max", "avg+max")
            wsum = act if need_avg else None
            wmax = act if need_max else None
            for r in range(1, p):            # shared windowed combine (XLU rolls)
                rolled = pltpu.roll(act, shift=tb - r, axis=1)    # act[:, l+r]
                if need_avg:
                    wsum = wsum + rolled
                if need_max:
                    wmax = jnp.maximum(wmax, rolled)
            comb = None
            if need_avg:
                comb = wsum * (1.0 / p)
            if need_max:
                comb = wmax if comb is None else comb + wmax
            # One lane-compaction matmul with a host-built 0/1 selection matrix
            # keeps the pooled output lane-dense (no trailing-dim-2 reshape).
            act = jnp.dot(comb, smat_ref[...],
                          preferred_element_type=jnp.float32)
        o_ref[...] = act.astype(o_ref.dtype)


# -----------------------------------------------------------------------------
# Wrappers
# -----------------------------------------------------------------------------
def _round_up(v, m):
    return (v + m - 1) // m * m


def _pick_tile_samples(n, seq_len, l_out, max_lanes):
    """Whole samples per tile: either the full batch (block == full array,
    always legal), or a divisor of N whose lane widths before and after
    pooling are multiples of 128 (BlockSpec constraint)."""
    if n * seq_len <= max_lanes:
        return n
    best = None
    for tn in range(1, n + 1):
        if n % tn:
            continue
        if tn * seq_len > max_lanes:
            break
        if (tn * seq_len) % _LANE == 0 and (tn * l_out) % _LANE == 0:
            best = tn
    # TODO(synk): pad N*L (partial last tile) instead of falling back to one
    # whole-batch block when no 128-aligned divisor of N exists.
    return best if best is not None else n


def _layer_call(x_cf, w_im, gamma, beta, batch, seq_len, pool_size, pool_type):
    """x_cf: (Cin_pad, batch*seq_len) lane-dense f32.  Returns (Cout_pad, batch*Lout)."""
    cin_pad, total_nl = x_cf.shape
    cout_pad = w_im.shape[0]

    p = pool_size if pool_type is not None else 1
    l_out = seq_len // p

    # Tile sizing from a VMEM budget: big tiles amortise the ~0.35us per-step
    # overhead; the pooled layer is capped because its lane-compaction matrix
    # is (tile_nl, tile_nl // p).
    if pool_type is not None:
        max_lanes = _MAX_POOL_LANES
    else:
        per_lane_bytes = (2 * cin_pad + 2 * cout_pad + 3 * cin_pad) * 4
        max_lanes = min(_MAX_PLAIN_LANES,
                        max(_LANE, _TILE_VMEM_BUDGET // per_lane_bytes))
    tn = _pick_tile_samples(batch, seq_len, l_out, max_lanes)
    num_tiles = batch // tn
    tile_nl = tn * seq_len
    tile_out = tn * l_out
    out_nl = batch * l_out

    # Persist the phase-0 conv output in VMEM scratch (skip the phase-1
    # recompute AND the second HBM sweep of x) whenever it fits the budget.
    store_conv = cout_pad * total_nl * 4 <= _STORE_CONV_BUDGET

    # Host-precomputed per-sample boundary masks (the in-kernel zero padding).
    # Identical for every tile -> resident inputs, no per-tile iota/mod chains.
    pos = jnp.arange(tile_nl, dtype=jnp.int32) % seq_len
    keep_first = (pos != 0).astype(jnp.float32).reshape(1, tile_nl)
    keep_last = (pos != seq_len - 1).astype(jnp.float32).reshape(1, tile_nl)

    inputs = [x_cf, w_im, gamma, beta, keep_first, keep_last]
    # NOTE: the constant operands (w_im / gamma / beta / masks / smat) could be
    # single-buffered with pipeline_mode=pl.Buffered(1) to save VMEM headroom;
    # left at the default double-buffering for maximum compatibility.
    in_specs = [
        # In store mode phase 1 reads the conv output from VMEM scratch, so the
        # activation DMA is parked on block 0 there (no second HBM sweep of x).
        pl.BlockSpec((cin_pad, tile_nl),
                     (lambda ph, j: (0, j * (1 - ph))) if store_conv
                     else (lambda ph, j: (0, j))),
        pl.BlockSpec((cout_pad, 3 * cin_pad), lambda ph, j: (0, 0)),
        pl.BlockSpec((cout_pad, 1), lambda ph, j: (0, 0)),
        pl.BlockSpec((cout_pad, 1), lambda ph, j: (0, 0)),
        pl.BlockSpec((1, tile_nl), lambda ph, j: (0, 0)),
        pl.BlockSpec((1, tile_nl), lambda ph, j: (0, 0)),
    ]
    if pool_type is not None:
        row = jnp.arange(tile_nl, dtype=jnp.int32).reshape(tile_nl, 1)
        col = jnp.arange(tile_out, dtype=jnp.int32).reshape(1, tile_out)
        smat = (((row // seq_len) == (col // l_out))
                & ((row % seq_len) == (col % l_out) * p)).astype(jnp.float32)
        inputs.append(smat)
        in_specs.append(pl.BlockSpec((tile_nl, tile_out), lambda ph, j: (0, 0)))

    scratch_shapes = [pltpu.VMEM((cout_pad, 1), jnp.float32),        # sum(y)
                      pltpu.VMEM((cout_pad, 1), jnp.float32),        # sum(y*y)
                      pltpu.VMEM((3 * cin_pad, tile_nl), jnp.float32)]  # im2col
    if store_conv:
        scratch_shapes.append(pltpu.VMEM((cout_pad, total_nl), jnp.float32))

    kernel = functools.partial(
        _layer_kernel, tile_nl=tile_nl, pool_size=pool_size,
        pool_type=pool_type, inv_count=1.0 / total_nl,
        store_conv=store_conv, single_tile=(num_tiles == 1))

    return pl.pallas_call(
        kernel,
        out_shape=jax.ShapeDtypeStruct((cout_pad, out_nl), x_cf.dtype),
        grid=(2, num_tiles),                                  # (phase, batch tile)
        in_specs=in_specs,
        # Phase 0 parks the output on block 0: the block index never changes
        # during phase 0, so the (unwritten) resident block is never flushed;
        # phase 1 maps to block j and writes every block exactly once, in
        # order, lane-dense.
        out_specs=pl.BlockSpec((cout_pad, tile_out), lambda ph, j: (0, ph * j)),
        scratch_shapes=scratch_shapes,
        compiler_params=pltpu.CompilerParams(
            # Stats accumulate across batch tiles and the conv scratch / stats
            # are consumed in phase 1 -> both grid axes stay sequential.
            # TODO(synk): v7x megacore split (two calls + partial-stat reduce).
            dimension_semantics=("arbitrary", "arbitrary"),
            vmem_limit_bytes=_VMEM_LIMIT_BYTES),
    )(*inputs)


def conv1d_block_forward(x_ncl, params, pool_size=2, pool_type="avg"):
    """x_ncl: (N, C_in, L) float32, PyTorch NCL layout."""
    if pool_type not in (None, "avg", "max", "avg+max"):
        raise ValueError("Incorrect argument!")
    n, c, l = x_ncl.shape
    c_pad = _round_up(c, _SUBLANE_F32)
    # Boundary glue: NCL -> lane-dense (C, N*L); channels padded to the f32
    # sublane tile so every in-kernel operand stays (8,128)-aligned.
    h = jnp.transpose(x_ncl, (1, 0, 2)).reshape(c, n * l)
    h = jnp.pad(h, ((0, c_pad - c), (0, 0)))

    num_layers = len(params)
    cur_l = l
    cout = c
    for li, (w, b, gamma, beta) in enumerate(params):
        del b  # Conv bias cancels exactly in training-mode BatchNorm.
        cout, cin, _ = w.shape
        cin_pad = _round_up(cin, _SUBLANE_F32)
        cout_pad = _round_up(cout, _SUBLANE_F32)
        # (Cout, Cin, 3) -> (Cout_pad, 3*Cin_pad): taps stacked along the
        # contraction dim to match the in-kernel im2col operand [x_-1; x; x_+1].
        w_pad = jnp.pad(w, ((0, cout_pad - cout), (0, cin_pad - cin), (0, 0)))
        w_im = jnp.concatenate(
            [w_pad[:, :, 0], w_pad[:, :, 1], w_pad[:, :, 2]], axis=1)
        # Padded channels get gamma=beta=0 -> their output is exactly 0.
        g_pad = jnp.pad(gamma, (0, cout_pad - cout)).reshape(cout_pad, 1)
        bt_pad = jnp.pad(beta, (0, cout_pad - cout)).reshape(cout_pad, 1)

        do_pool = (pool_type is not None) and (li == num_layers - 1)
        h = _layer_call(h, w_im, g_pad, bt_pad, n, cur_l, pool_size,
                        pool_type if do_pool else None)
        if do_pool:
            cur_l = cur_l // pool_size
    return jnp.transpose(h[:cout].reshape(cout, n, cur_l), (1, 0, 2))  # (N,C,Lout)


# -----------------------------------------------------------------------------
# Deterministic parameter construction (module shapes; random values so the
# gamma / beta paths are actually exercised — PyTorch's init would be zero
# bias, unit gamma, zero beta with identical forward semantics).
# -----------------------------------------------------------------------------
def make_params(key, in_channels, out_channels, num_layers):
    params = []
    for i in range(num_layers):
        if i % 2 == 0:
            cin, cout = in_channels, out_channels
        else:
            cin, cout = out_channels, in_channels
        key, kw, kb, kg, kbt = jax.random.split(key, 5)
        w = jax.random.normal(kw, (cout, cin, 3), jnp.float32) * 0.1   # (O, I, K)
        b = jax.random.normal(kb, (cout,), jnp.float32) * 0.1
        gamma = 1.0 + jax.random.normal(kg, (cout,), jnp.float32) * 0.1
        beta = jax.random.normal(kbt, (cout,), jnp.float32) * 0.1
        params.append((w, b, gamma, beta))
    return params


# -----------------------------------------------------------------------------
# Pure-JAX reference (correctness check, includes the conv bias — it cancels
# mathematically inside training-mode BatchNorm).
# -----------------------------------------------------------------------------
def reference_forward(x_ncl, params, pool_size=2, pool_type="avg"):
    h = x_ncl
    for (w, b, gamma, beta) in params:
        h = lax.conv_general_dilated(
            h, w, window_strides=(1,), padding=[(1, 1)],
            dimension_numbers=("NCH", "OIH", "NCH"))
        h = h + b.reshape(1, -1, 1)
        mean = jnp.mean(h, axis=(0, 2), keepdims=True)
        var = jnp.mean((h - mean) ** 2, axis=(0, 2), keepdims=True)
        h = (h - mean) / jnp.sqrt(var + EPS)
        h = h * gamma.reshape(1, -1, 1) + beta.reshape(1, -1, 1)
        h = jnp.maximum(h, 0.0)
    if pool_type is None:
        return h
    n, c, l = h.shape
    l_out = l // pool_size
    hr = h[:, :, :l_out * pool_size].reshape(n, c, l_out, pool_size)
    if pool_type == "avg":
        return jnp.mean(hr, axis=-1)
    if pool_type == "max":
        return jnp.max(hr, axis=-1)
    if pool_type == "avg+max":
        return jnp.mean(hr, axis=-1) + jnp.max(hr, axis=-1)
    raise ValueError("Incorrect argument!")


# -----------------------------------------------------------------------------
if __name__ == "__main__":
    N, IN_C, OUT_C, L, NUM_LAYERS = 2, 4, 8, 16, 2

    key = jax.random.PRNGKey(0)
    key, kx = jax.random.split(key)
    x = jax.random.normal(kx, (N, IN_C, L), jnp.float32)
    params = make_params(key, IN_C, OUT_C, NUM_LAYERS)

    for pt in ("avg", "max", "avg+max", None):
        out = jax.block_until_ready(
            conv1d_block_forward(x, params, pool_size=2, pool_type=pt))
        ref = reference_forward(x, params, pool_size=2, pool_type=pt)
        assert out.shape == ref.shape, (pt, out.shape, ref.shape)
        max_err = float(jnp.max(jnp.abs(out - ref)))
        assert jnp.allclose(out, ref, atol=1e-4, rtol=1e-4), (pt, max_err)

    print("KERNEL_OK")
</pallas_src>

<mosaic_0001>
module attributes {stable_mosaic.version = 11 : i64} {
  func.func @_layer_kernel(%arg0: i32, %arg1: i32, %arg2: memref<8x32xf32, #tpu.memory_space<vmem>>, %arg3: memref<8x24xf32, #tpu.memory_space<vmem>>, %arg4: memref<8x1xf32, #tpu.memory_space<vmem>>, %arg5: memref<8x1xf32, #tpu.memory_space<vmem>>, %arg6: memref<1x32xf32, #tpu.memory_space<vmem>>, %arg7: memref<1x32xf32, #tpu.memory_space<vmem>>, %arg8: memref<8x32xf32, #tpu.memory_space<vmem>>, %arg9: memref<8x1xf32, #tpu.memory_space<vmem>>, %arg10: memref<8x1xf32, #tpu.memory_space<vmem>>, %arg11: memref<24x32xf32, #tpu.memory_space<vmem>>, %arg12: memref<8x32xf32, #tpu.memory_space<vmem>>) attributes {dimension_semantics = [#tpu.dimension_semantics<arbitrary>, #tpu.dimension_semantics<arbitrary>], iteration_bounds = array<i64: 2, 1>, scalar_prefetch = 0 : i64, scratch_operands = 4 : i64, tpu.core_type = #tpu.core_type<tc>, window_params = [{transform_indices = @transform_0, window_bounds = array<i64: 8, 32>}, {pipeline_mode = #tpu.pipeline_mode<synchronous>, transform_indices = @transform_1, window_bounds = array<i64: 8, 24>}, {pipeline_mode = #tpu.pipeline_mode<synchronous>, transform_indices = @transform_2, window_bounds = array<i64: 8, 1>}, {pipeline_mode = #tpu.pipeline_mode<synchronous>, transform_indices = @transform_3, window_bounds = array<i64: 8, 1>}, {pipeline_mode = #tpu.pipeline_mode<synchronous>, transform_indices = @transform_4, window_bounds = array<i64: 1, 32>}, {pipeline_mode = #tpu.pipeline_mode<synchronous>, transform_indices = @transform_5, window_bounds = array<i64: 1, 32>}, {transform_indices = @transform_6, window_bounds = array<i64: 8, 32>}]} {
    %c0_i32 = arith.constant 0 : i32
    %0 = arith.cmpi eq, %arg0, %c0_i32 : i32
    %c0_i32_0 = arith.constant 0 : i32
    %1 = arith.cmpi eq, %arg1, %c0_i32_0 : i32
    %2 = arith.andi %0, %1 : i1
    %3 = arith.extui %2 : i1 to i32
    %c0_i32_1 = arith.constant 0 : i32
    %4 = arith.cmpi ne, %3, %c0_i32_1 : i32
    scf.if %4 {
      %cst = arith.constant 0.000000e+00 : f32
      %11 = vector.broadcast %cst : f32 to vector<8x1xf32>
      %c0 = arith.constant 0 : index
      %c0_5 = arith.constant 0 : index
      %12 = vector.load %arg9[%c0, %c0_5] : memref<8x1xf32, #tpu.memory_space<vmem>>, vector<8x1xf32>
      tpu.vector_store %arg9[%c0, %c0_5], %11 {strides = array<i32>} : memref<8x1xf32, #tpu.memory_space<vmem>>, vector<8x1xf32>,
      %cst_6 = arith.constant 0.000000e+00 : f32
      %13 = vector.broadcast %cst_6 : f32 to vector<8x1xf32>
      %c0_7 = arith.constant 0 : index
      %c0_8 = arith.constant 0 : index
      %14 = vector.load %arg10[%c0_7, %c0_8] : memref<8x1xf32, #tpu.memory_space<vmem>>, vector<8x1xf32>
      tpu.vector_store %arg10[%c0_7, %c0_8], %13 {strides = array<i32>} : memref<8x1xf32, #tpu.memory_space<vmem>>, vector<8x1xf32>,
    } else {
    }
    %c0_i32_2 = arith.constant 0 : i32
    %5 = arith.cmpi eq, %arg0, %c0_i32_2 : i32
    %6 = arith.extui %5 : i1 to i32
    %c0_i32_3 = arith.constant 0 : i32
    %7 = arith.cmpi ne, %6, %c0_i32_3 : i32
    scf.if %7 {
      %c0 = arith.constant 0 : index
      %c0_5 = arith.constant 0 : index
      %11 = vector.load %arg2[%c0, %c0_5] : memref<8x32xf32, #tpu.memory_space<vmem>>, vector<8x32xf32>
      %c1_i32_6 = arith.constant 1 : i32
      %12 = tpu.dynamic_rotate %11 by %c1_i32_6 dim 1 : vector<8x32xf32>, i32 -> vector<8x32xf32>
      %c0_7 = arith.constant 0 : index
      %c0_8 = arith.constant 0 : index
      %13 = vector.load %arg6[%c0_7, %c0_8] : memref<1x32xf32, #tpu.memory_space<vmem>>, vector<1x32xf32>
      %14 = vector.broadcast %13 : vector<1x32xf32> to vector<8x32xf32>
      %15 = arith.mulf %12, %14 : vector<8x32xf32>
      %c0_9 = arith.constant 0 : index
      %c0_10 = arith.constant 0 : index
      %16 = vector.load %arg11[%c0_9, %c0_10] : memref<24x32xf32, #tpu.memory_space<vmem>>, vector<8x32xf32>
      tpu.vector_store %arg11[%c0_9, %c0_10], %15 {strides = array<i32>} : memref<24x32xf32, #tpu.memory_space<vmem>>, vector<8x32xf32>,
      %c8 = arith.constant 8 : index
      %c0_11 = arith.constant 0 : index
      %17 = vector.load %arg11[%c8, %c0_11] : memref<24x32xf32, #tpu.memory_space<vmem>>, vector<8x32xf32>
      tpu.vector_store %arg11[%c8, %c0_11], %11 {strides = array<i32>} : memref<24x32xf32, #tpu.memory_space<vmem>>, vector<8x32xf32>,
      %c31_i32 = arith.constant 31 : i32
      %18 = tpu.dynamic_rotate %11 by %c31_i32 dim 1 : vector<8x32xf32>, i32 -> vector<8x32xf32>
      %c0_12 = arith.constant 0 : index
      %c0_13 = arith.constant 0 : index
      %19 = vector.load %arg7[%c0_12, %c0_13] : memref<1x32xf32, #tpu.memory_space<vmem>>, vector<1x32xf32>
      %20 = vector.broadcast %19 : vector<1x32xf32> to vector<8x32xf32>
      %21 = arith.mulf %18, %20 : vector<8x32xf32>
      %c16 = arith.constant 16 : index
      %c0_14 = arith.constant 0 : index
      %22 = vector.load %arg11[%c16, %c0_14] : memref<24x32xf32, #tpu.memory_space<vmem>>, vector<8x32xf32>
      tpu.vector_store %arg11[%c16, %c0_14], %21 {strides = array<i32>} : memref<24x32xf32, #tpu.memory_space<vmem>>, vector<8x32xf32>,
      %c0_15 = arith.constant 0 : index
      %c0_16 = arith.constant 0 : index
      %23 = vector.load %arg3[%c0_15, %c0_16] : memref<8x24xf32, #tpu.memory_space<vmem>>, vector<8x24xf32>
      %c0_17 = arith.constant 0 : index
      %c0_18 = arith.constant 0 : index
      %24 = vector.load %arg11[%c0_17, %c0_18] : memref<24x32xf32, #tpu.memory_space<vmem>>, vector<24x32xf32>
      %cst = arith.constant dense<0.000000e+00> : vector<8x32xf32>
      %25 = tpu.matmul %23, %24, %cst {dimension_numbers = #tpu.dot_dimension_numbers<[1], [0], [0], [1], [0, 0, 1, 1], [], []>} : vector<8x24xf32>, vector<24x32xf32>, vector<8x32xf32> -> vector<8x32xf32>
      %c0_19 = arith.constant 0 : index
      %c0_20 = arith.constant 0 : index
      %26 = vector.load %arg9[%c0_19, %c0_20] : memref<8x1xf32, #tpu.memory_space<vmem>>, vector<8x1xf32>
      %cst_21 = arith.constant dense<0.000000e+00> : vector<8xf32>
      %27 = vector.multi_reduction <add>, %25, %cst_21 [1] : vector<8x32xf32> to vector<8xf32>
      %28 = vector.shape_cast %27 : vector<8xf32> to vector<8x1xf32>
      %29 = arith.addf %26, %28 : vector<8x1xf32>
      %c0_22 = arith.constant 0 : index
      %c0_23 = arith.constant 0 : index
      %30 = vector.load %arg9[%c0_22, %c0_23] : memref<8x1xf32, #tpu.memory_space<vmem>>, vector<8x1xf32>
      tpu.vector_store %arg9[%c0_22, %c0_23], %29 {strides = array<i32>} : memref<8x1xf32, #tpu.memory_space<vmem>>, vector<8x1xf32>,
      %c0_24 = arith.constant 0 : index
      %c0_25 = arith.constant 0 : index
      %31 = vector.load %arg10[%c0_24, %c0_25] : memref<8x1xf32, #tpu.memory_space<vmem>>, vector<8x1xf32>
      %32 = arith.mulf %25, %25 : vector<8x32xf32>
      %cst_26 = arith.constant dense<0.000000e+00> : vector<8xf32>
      %33 = vector.multi_reduction <add>, %32, %cst_26 [1] : vector<8x32xf32> to vector<8xf32>
      %34 = vector.shape_cast %33 : vector<8xf32> to vector<8x1xf32>
      %35 = arith.addf %31, %34 : vector<8x1xf32>
      %c0_27 = arith.constant 0 : index
      %c0_28 = arith.constant 0 : index
      %36 = vector.load %arg10[%c0_27, %c0_28] : memref<8x1xf32, #tpu.memory_space<vmem>>, vector<8x1xf32>
      tpu.vector_store %arg10[%c0_27, %c0_28], %35 {strides = array<i32>} : memref<8x1xf32, #tpu.memory_space<vmem>>, vector<8x1xf32>,
      %c0_29 = arith.constant 0 : index
      %c0_30 = arith.constant 0 : index
      %37 = vector.load %arg12[%c0_29, %c0_30] : memref<8x32xf32, #tpu.memory_space<vmem>>, vector<8x32xf32>
      tpu.vector_store %arg12[%c0_29, %c0_30], %25 {strides = array<i32>} : memref<8x32xf32, #tpu.memory_space<vmem>>, vector<8x32xf32>,
    } else {
    }
    %c1_i32 = arith.constant 1 : i32
    %8 = arith.cmpi eq, %arg0, %c1_i32 : i32
    %9 = arith.extui %8 : i1 to i32
    %c0_i32_4 = arith.constant 0 : i32
    %10 = arith.cmpi ne, %9, %c0_i32_4 : i32
    scf.if %10 {
      %c0 = arith.constant 0 : index
      %c0_5 = arith.constant 0 : index
      %11 = vector.load %arg12[%c0, %c0_5] : memref<8x32xf32, #tpu.memory_space<vmem>>, vector<8x32xf32>
      %c0_6 = arith.constant 0 : index
      %c0_7 = arith.constant 0 : index
      %12 = vector.load %arg9[%c0_6, %c0_7] : memref<8x1xf32, #tpu.memory_space<vmem>>, vector<8x1xf32>
      %cst = arith.constant 3.125000e-02 : f32
      %13 = vector.broadcast %cst : f32 to vector<8x1xf32>
      %14 = arith.mulf %12, %13 : vector<8x1xf32>
      %c0_8 = arith.constant 0 : index
      %c0_9 = arith.constant 0 : index
      %15 = vector.load %arg10[%c0_8, %c0_9] : memref<8x1xf32, #tpu.memory_space<vmem>>, vector<8x1xf32>
      %cst_10 = arith.constant 3.125000e-02 : f32
      %16 = vector.broadcast %cst_10 : f32 to vector<8x1xf32>
      %17 = arith.mulf %15, %16 : vector<8x1xf32>
      %18 = arith.mulf %14, %14 : vector<8x1xf32>
      %19 = arith.subf %17, %18 : vector<8x1xf32>
      %cst_11 = arith.constant 0.000000e+00 : f32
      %20 = vector.broadcast %cst_11 : f32 to vector<8x1xf32>
      %21 = arith.maximumf %19, %20 : vector<8x1xf32>
      %c0_12 = arith.constant 0 : index
      %c0_13 = arith.constant 0 : index
      %22 = vector.load %arg4[%c0_12, %c0_13] : memref<8x1xf32, #tpu.memory_space<vmem>>, vector<8x1xf32>
      %cst_14 = arith.constant 9.99999974E-6 : f32
      %23 = vector.broadcast %cst_14 : f32 to vector<8x1xf32>
      %24 = arith.addf %21, %23 : vector<8x1xf32>
      %25 = math.rsqrt %24 : vector<8x1xf32>
      %26 = arith.mulf %22, %25 : vector<8x1xf32>
      %c0_15 = arith.constant 0 : index
      %c0_16 = arith.constant 0 : index
      %27 = vector.load %arg5[%c0_15, %c0_16] : memref<8x1xf32, #tpu.memory_space<vmem>>, vector<8x1xf32>
      %28 = arith.mulf %14, %26 : vector<8x1xf32>
      %29 = arith.subf %27, %28 : vector<8x1xf32>
      %30 = vector.broadcast %26 : vector<8x1xf32> to vector<8x32xf32>
      %31 = arith.mulf %11, %30 : vector<8x32xf32>
      %32 = vector.broadcast %29 : vector<8x1xf32> to vector<8x32xf32>
      %33 = arith.addf %31, %32 : vector<8x32xf32>
      %cst_17 = arith.constant 0.000000e+00 : f32
      %34 = vector.broadcast %cst_17 : f32 to vector<8x32xf32>
      %35 = arith.maximumf %33, %34 : vector<8x32xf32>
      %c0_18 = arith.constant 0 : index
      %c0_19 = arith.constant 0 : index
      %36 = vector.load %arg8[%c0_18, %c0_19] : memref<8x32xf32, #tpu.memory_space<vmem>>, vector<8x32xf32>
      tpu.vector_store %arg8[%c0_18, %c0_19], %35 {strides = array<i32>} : memref<8x32xf32, #tpu.memory_space<vmem>>, vector<8x32xf32>,
    } else {
    }
    return
  }
  func.func @transform_0(%arg0: i32, %arg1: i32) -> (i32, i32) {
    %c1_i32 = arith.constant 1 : i32
    %0 = arith.subi %c1_i32, %arg0 : i32
    %1 = arith.muli %arg1, %0 : i32
    %c0_i32 = arith.constant 0 : i32
    %c0_i32_0 = arith.constant 0 : i32
    return %c0_i32, %1 : i32, i32
  }
  func.func @transform_1(%arg0: i32, %arg1: i32) -> (i32, i32) {
    %c0_i32 = arith.constant 0 : i32
    %c0_i32_0 = arith.constant 0 : i32
    %c0_i32_1 = arith.constant 0 : i32
    return %c0_i32, %c0_i32_0 : i32, i32
  }
  func.func @transform_2(%arg0: i32, %arg1: i32) -> (i32, i32) {
    %c0_i32 = arith.constant 0 : i32
    %c0_i32_0 = arith.constant 0 : i32
    %c0_i32_1 = arith.constant 0 : i32
    return %c0_i32, %c0_i32_0 : i32, i32
  }
  func.func @transform_3(%arg0: i32, %arg1: i32) -> (i32, i32) {
    %c0_i32 = arith.constant 0 : i32
    %c0_i32_0 = arith.constant 0 : i32
    %c0_i32_1 = arith.constant 0 : i32
    return %c0_i32, %c0_i32_0 : i32, i32
  }
  func.func @transform_4(%arg0: i32, %arg1: i32) -> (i32, i32) {
    %c0_i32 = arith.constant 0 : i32
    %c0_i32_0 = arith.constant 0 : i32
    %c0_i32_1 = arith.constant 0 : i32
    return %c0_i32, %c0_i32_0 : i32, i32
  }
  func.func @transform_5(%arg0: i32, %arg1: i32) -> (i32, i32) {
    %c0_i32 = arith.constant 0 : i32
    %c0_i32_0 = arith.constant 0 : i32
    %c0_i32_1 = arith.constant 0 : i32
    return %c0_i32, %c0_i32_0 : i32, i32
  }
  func.func @transform_6(%arg0: i32, %arg1: i32) -> (i32, i32) {
    %0 = arith.muli %arg0, %arg1 : i32
    %c0_i32 = arith.constant 0 : i32
    %c0_i32_0 = arith.constant 0 : i32
    return %c0_i32, %0 : i32, i32
  }
}

</mosaic_0001>

<llo_original>
// kernel: tpu_custom_call.1
$region0: #{tpu_custom_call.1}
  #allocation0 [shape = 'u32[]', space=smem, size = 0x4, offset = 0x4, fixed_abs, tag = 'smem constant byte address 0x4 - core index']
  #allocation1 [shape = 'u32[144,128]{1,0:T(1,128)}', space=vmem, size = 0x12000, scoped, tag = 'internal scratch']
  #allocation2 [shape = 'f32[8,1]{1,0:T(8,128)}', space=vmem, size = 0x1000, scoped, tag = 'scratch operand']
  #allocation3 [shape = 'f32[8,1]{1,0:T(8,128)}', space=vmem, size = 0x1000, scoped, tag = 'scratch operand']
  #allocation4 [shape = 'f32[24,32]{1,0:T(8,128)}', space=vmem, size = 0x3000, scoped, tag = 'scratch operand']
  #allocation5 [shape = 'f32[8,32]{1,0:T(8,128)}', space=vmem, size = 0x1000, scoped, tag = 'scratch operand']
  %s0 = inlined_call_operand.vmem [shape: f32[8,32], index: 0, kind: input, shape index: {}]
  %s1 = inlined_call_operand.vmem [shape: f32[8,24], index: 1, kind: input, shape index: {}]
  %s2 = inlined_call_operand.vmem [shape: f32[8,1], index: 2, kind: input, shape index: {}]
  %s3 = inlined_call_operand.vmem [shape: f32[8,1], index: 3, kind: input, shape index: {}]
  %s4 = inlined_call_operand.vmem [shape: f32[1,32], index: 4, kind: input, shape index: {}]
  %s5 = inlined_call_operand.vmem [shape: f32[1,32], index: 5, kind: input, shape index: {}]
  %s6 = inlined_call_operand.hbm [shape: f32[8,32], index: 6, kind: output, shape index: {}]
  %s7 = sld [smem:[#allocation0]]
  $region69: #{tpu_custom_call.1} parent=0
    _
  %s9 = ssub.s32 1, %s7
  %s10 = scalar_select 0, %s9, %s7
  $region1: #{tpu_custom_call.1} parent=0
    #allocation6 [shape = 'u8[8192]{0}', space=vmem, size = 0x2000, scoped, tag = 'output window, operand 0']
    #allocation7 [shape = 's32[2]{0}', space=sflag, size = 0x8, scoped, tag = 'scoped memory for tpu_custom_call.1']
    %11 = vsyncpa [#allocation7], 0
    %s12 = scalar_lea.sflag [#allocation7], 1
    %13 = vsyncpa %s12, 0
    loop: start=0, step=1, limit=4
    $region2: #{tpu_custom_call.1} parent=1 // loop_pre_header
      _
    $region3: #{tpu_custom_call.1} parent=1 // loop_header
      %s15 = sphi 0, %s19
      %p16 = scmp.ge.s32.totalorder %s15, 4
      %s22 = sphi 0, %s34
      %s23 = sphi 0, %s30
      %s24 = sphi 0, %s22
      %s25 = sphi 0, %s23
      %s26 = sphi 0, %s24
      %s27 = sphi 0, %s25
      %s41 = sphi 0, %s43
      %s44 = sphi 0, %s41
      %s45 = sphi 0, %s44
      %s61 = sphi 0, %s45
      %s65 = sphi 0, %s65
      %s67 = sphi 0, %s65
      %s68 = sphi 0, %s67
      %s82 = sphi 0, %s68
      %s86 = sphi 0, %s86
      %s88 = sphi 0, %s86
      %s89 = sphi 0, %s88
      %s103 = sphi 0, %s89
      %s107 = sphi 0, %s107
      %s109 = sphi 0, %s107
      %s110 = sphi 0, %s109
      %s124 = sphi 0, %s110
      %s128 = sphi 0, %s128
      %s130 = sphi 0, %s128
      %s131 = sphi 0, %s130
      %s145 = sphi 0, %s131
      %s149 = sphi 0, %s149
      %s151 = sphi 0, %s149
      %s152 = sphi 0, %s151
      %s166 = sphi 0, %s152
      %s174 = sphi 0, %s176
      %s177 = sphi 0, %s174
      %s178 = sphi 0, %s177
      %s194 = sphi 0, %s178
    $region4: #{tpu_custom_call.1} parent=1 // loop_header_branch
      %18 = sbr.rel (%p16) target = $region8
    $region5: #{tpu_custom_call.1} parent=1 // loop_body
      %s20 = ssub.s32 %s15, 1
      %s21 = ssub.s32 %s15, 2
      %s28 = sadd.s32 1, %s23
      %p29 = scmp.ge.s32.totalorder %s28, 1
      %s30 = scalar_select %p29, 0, %s28
      %s31 = sadd.s32 1, %s22
      %s32 = scalar_select %p29, %s31, %s22
      %p33 = scmp.ge.s32.totalorder %s32, 2
      %s34 = scalar_select %p33, 0, %s32
      %s35 = ssub.s32 1, %s22
      %s36 = smul.u32 %s23, %s35
      %s37 = ssub.s32 1, %s34
      %s38 = smul.u32 %s30, %s37
      %s39 = ssub.s32 %s36, %s38
      %p40 = scmp.eq.s32.totalorder %s39, 0
      %s42 = sadd.s32 %s41, 1
      %s43 = scalar_select %p40, %s41, %s42
      %p46 = pneg %p40
      %p47 = scmp.eq.s32.totalorder %s15, 1
      %p48 = por %p46, %p47
      %p49 = scmp.ne.s32.totalorder %s41, %s44
      %p50 = scmp.eq.s32.totalorder %s15, 0
      %p51 = por %p49, %p50
      %p52 = scmp.ne.s32.totalorder %s41, %s44
      %p53 = scmp.eq.s32.totalorder %s20, 1
      %p54 = por %p52, %p53
      %p55 = scmp.ne.s32.totalorder %s44, %s45
      %p56 = scmp.eq.s32.totalorder %s20, 0
      %p57 = por %p55, %p56
      %p58 = scmp.ne.s32.totalorder %s44, %s45
      %p59 = scmp.eq.s32.totalorder %s21, 1
      %p60 = por %p58, %p59
      %p62 = scmp.ne.s32.totalorder %s45, %s61
      %p63 = scmp.eq.s32.totalorder %s21, 0
      %p64 = por %p62, %p63
      %s66 = sadd.s32 %s65, 1
      %p69 = scmp.eq.s32.totalorder %s15, 1
      %p70 = scmp.ne.s32.totalorder %s65, %s67
      %p71 = scmp.eq.s32.totalorder %s15, 0
      %p72 = por %p70, %p71
      %p73 = scmp.ne.s32.totalorder %s65, %s67
      %p74 = scmp.eq.s32.totalorder %s20, 1
      %p75 = por %p73, %p74
      %p76 = scmp.ne.s32.totalorder %s67, %s68
      %p77 = scmp.eq.s32.totalorder %s20, 0
      %p78 = por %p76, %p77
      %p79 = scmp.ne.s32.totalorder %s67, %s68
      %p80 = scmp.eq.s32.totalorder %s21, 1
      %p81 = por %p79, %p80
      %p83 = scmp.ne.s32.totalorder %s68, %s82
      %p84 = scmp.eq.s32.totalorder %s21, 0
      %p85 = por %p83, %p84
      %s87 = sadd.s32 %s86, 1
      %p90 = scmp.eq.s32.totalorder %s15, 1
      %p91 = scmp.ne.s32.totalorder %s86, %s88
      %p92 = scmp.eq.s32.totalorder %s15, 0
      %p93 = por %p91, %p92
      %p94 = scmp.ne.s32.totalorder %s86, %s88
      %p95 = scmp.eq.s32.totalorder %s20, 1
      %p96 = por %p94, %p95
      %p97 = scmp.ne.s32.totalorder %s88, %s89
      %p98 = scmp.eq.s32.totalorder %s20, 0
      %p99 = por %p97, %p98
      %p100 = scmp.ne.s32.totalorder %s88, %s89
      %p101 = scmp.eq.s32.totalorder %s21, 1
      %p102 = por %p100, %p101
      %p104 = scmp.ne.s32.totalorder %s89, %s103
      %p105 = scmp.eq.s32.totalorder %s21, 0
      %p106 = por %p104, %p105
      %s108 = sadd.s32 %s107, 1
      %p111 = scmp.eq.s32.totalorder %s15, 1
      %p112 = scmp.ne.s32.totalorder %s107, %s109
      %p113 = scmp.eq.s32.totalorder %s15, 0
      %p114 = por %p112, %p113
      %p115 = scmp.ne.s32.totalorder %s107, %s109
      %p116 = scmp.eq.s32.totalorder %s20, 1
      %p117 = por %p115, %p116
      %p118 = scmp.ne.s32.totalorder %s109, %s110
      %p119 = scmp.eq.s32.totalorder %s20, 0
      %p120 = por %p118, %p119
      %p121 = scmp.ne.s32.totalorder %s109, %s110
      %p122 = scmp.eq.s32.totalorder %s21, 1
      %p123 = por %p121, %p122
      %p125 = scmp.ne.s32.totalorder %s110, %s124
      %p126 = scmp.eq.s32.totalorder %s21, 0
      %p127 = por %p125, %p126
      %s129 = sadd.s32 %s128, 1
      %p132 = scmp.eq.s32.totalorder %s15, 1
      %p133 = scmp.ne.s32.totalorder %s128, %s130
      %p134 = scmp.eq.s32.totalorder %s15, 0
      %p135 = por %p133, %p134
      %p136 = scmp.ne.s32.totalorder %s128, %s130
      %p137 = scmp.eq.s32.totalorder %s20, 1
      %p138 = por %p136, %p137
      %p139 = scmp.ne.s32.totalorder %s130, %s131
      %p140 = scmp.eq.s32.totalorder %s20, 0
      %p141 = por %p139, %p140
      %p142 = scmp.ne.s32.totalorder %s130, %s131
      %p143 = scmp.eq.s32.totalorder %s21, 1
      %p144 = por %p142, %p143
      %p146 = scmp.ne.s32.totalorder %s131, %s145
      %p147 = scmp.eq.s32.totalorder %s21, 0
      %p148 = por %p146, %p147
      %s150 = sadd.s32 %s149, 1
      %p153 = scmp.eq.s32.totalorder %s15, 1
      %p154 = scmp.ne.s32.totalorder %s149, %s151
      %p155 = scmp.eq.s32.totalorder %s15, 0
      %p156 = por %p154, %p155
      %p157 = scmp.ne.s32.totalorder %s149, %s151
      %p158 = scmp.eq.s32.totalorder %s20, 1
      %p159 = por %p157, %p158
      %p160 = scmp.ne.s32.totalorder %s151, %s152
      %p161 = scmp.eq.s32.totalorder %s20, 0
      %p162 = por %p160, %p161
      %p163 = scmp.ne.s32.totalorder %s151, %s152
      %p164 = scmp.eq.s32.totalorder %s21, 1
      %p165 = por %p163, %p164
      %p167 = scmp.ne.s32.totalorder %s152, %s166
      %p168 = scmp.eq.s32.totalorder %s21, 0
      %p169 = por %p167, %p168
      %s170 = smul.u32 %s22, %s23
      %s171 = smul.u32 %s34, %s30
      %s172 = ssub.s32 %s170, %s171
      %p173 = scmp.eq.s32.totalorder %s172, 0
      %s175 = sadd.s32 %s174, 1
      %s176 = scalar_select %p173, %s174, %s175
      %p179 = pneg %p173
      %p180 = scmp.eq.s32.totalorder %s15, 1
      %p181 = por %p179, %p180
      %p182 = scmp.ne.s32.totalorder %s174, %s177
      %p183 = scmp.eq.s32.totalorder %s15, 0
      %p184 = por %p182, %p183
      %p185 = scmp.ne.s32.totalorder %s174, %s177
      %p186 = scmp.eq.s32.totalorder %s20, 1
      %p187 = por %p185, %p186
      %p188 = scmp.ne.s32.totalorder %s177, %s178
      %p189 = scmp.eq.s32.totalorder %s20, 0
      %p190 = por %p188, %p189
      %p191 = scmp.ne.s32.totalorder %s177, %s178
      %p192 = scmp.eq.s32.totalorder %s21, 1
      %p193 = por %p191, %p192
      %p195 = scmp.ne.s32.totalorder %s178, %s194
      %p196 = scmp.eq.s32.totalorder %s21, 0
      %p197 = por %p195, %p196
      %p198 = scmp.le.s32.totalorder 1, %s15
      %p199 = scmp.lt.s32.totalorder %s15, 3
      %p200 = pnand %p198, %p199
      %p201 = pneg %p200
      // Predicated region
      $region9: #{tpu_custom_call.1} parent=5 // pred_check
        _
      $region10: #{tpu_custom_call.1} parent=5 // pred_check_branch
        %203 = sbr.rel (%p200) target = $region12
      $region11: #{tpu_custom_call.1} parent=5 // pred_region
        %s204 = ssub.s32 %s15, 1
        // Predicated region
        $region13: #{tpu_custom_call.1} parent=11 // pred_check
          %p205 = pneg %p78
        $region14: #{tpu_custom_call.1} parent=11 // pred_check_branch
          %207 = sbr.rel (%p205) target = $region16
        $region15: #{tpu_custom_call.1} parent=11 // pred_region
          _
        $region16: #{tpu_custom_call.1} parent=11 // pred_fallthru
          _
        // Predicated region
        $region17: #{tpu_custom_call.1} parent=11 // pred_check
          %p208 = pneg %p99
        $region18: #{tpu_custom_call.1} parent=11 // pred_check_branch
          %210 = sbr.rel (%p208) target = $region20
        $region19: #{tpu_custom_call.1} parent=11 // pred_region
          _
        $region20: #{tpu_custom_call.1} parent=11 // pred_fallthru
          _
        // Predicated region
        $region21: #{tpu_custom_call.1} parent=11 // pred_check
          %p211 = pneg %p120
        $region22: #{tpu_custom_call.1} parent=11 // pred_check_branch
          %213 = sbr.rel (%p211) target = $region24
        $region23: #{tpu_custom_call.1} parent=11 // pred_region
          _
        $region24: #{tpu_custom_call.1} parent=11 // pred_fallthru
          _
        // Predicated region
        $region25: #{tpu_custom_call.1} parent=11 // pred_check
          %p214 = pneg %p141
        $region26: #{tpu_custom_call.1} parent=11 // pred_check_branch
          %216 = sbr.rel (%p214) target = $region28
        $region27: #{tpu_custom_call.1} parent=11 // pred_region
          _
        $region28: #{tpu_custom_call.1} parent=11 // pred_fallthru
          _
        // Predicated region
        $region29: #{tpu_custom_call.1} parent=11 // pred_check
          %p217 = pneg %p162
        $region30: #{tpu_custom_call.1} parent=11 // pred_check_branch
          %219 = sbr.rel (%p217) target = $region32
        $region31: #{tpu_custom_call.1} parent=11 // pred_region
          _
        $region32: #{tpu_custom_call.1} parent=11 // pred_fallthru
          _
      $region12: #{tpu_custom_call.1} parent=5 // pred_fallthru
        _
      %p220 = scmp.lt.s32.totalorder %s15, 2
      // Predicated region
      $region33: #{tpu_custom_call.1} parent=5 // pred_check
        %p221 = pneg %p220
      $region34: #{tpu_custom_call.1} parent=5 // pred_check_branch
        %223 = sbr.rel (%p221) target = $region36
      $region35: #{tpu_custom_call.1} parent=5 // pred_region
        // Predicated region
        $region37: #{tpu_custom_call.1} parent=35 // pred_check
          %p224 = pneg %p51
        $region38: #{tpu_custom_call.1} parent=35 // pred_check_branch
          %226 = sbr.rel (%p224) target = $region40
        $region39: #{tpu_custom_call.1} parent=35 // pred_region
          %s227 = ssub.s32 1, %s22
          %s228 = smul.u32 %s23, %s227
          %p229 = scmp.lt.s32.totalorder %s228, 0
          %s230 = scalar_select %p229, %s228, 0
          %s231 = smul.addr %s230, 8
          %s232 = scalar_lea.vmem %s0, %s231
          %s233 = ssub.s32 1, %s22
          %s234 = smul.u32 %s23, %s233
        $region40: #{tpu_custom_call.1} parent=35 // pred_fallthru
          _
      $region36: #{tpu_custom_call.1} parent=5 // pred_fallthru
        _
      %p235 = scmp.le.s32.totalorder 1, %s15
      %p236 = scmp.lt.s32.totalorder %s15, 3
      %p237 = pnand %p235, %p236
      %p238 = pneg %p237
      // Predicated region
      $region41: #{tpu_custom_call.1} parent=5 // pred_check
        _
      $region42: #{tpu_custom_call.1} parent=5 // pred_check_branch
        %240 = sbr.rel (%p237) target = $region44
      $region43: #{tpu_custom_call.1} parent=5 // pred_region
        %s241 = ssub.s32 %s15, 1
        %s242 = ssub.s32 1, %s24
        %s243 = smul.u32 %s25, %s242
        %p244 = scmp.lt.s32.totalorder %s243, 0
        %s245 = scalar_select %p244, %s243, 0
        %s246 = smul.addr %s245, 8
        %s247 = scalar_lea.vmem %s0, %s246
        %p248 = pneg %p57
        %p249 = pneg %p54
        %p250 = pneg %p78
        %p251 = pneg %p75
        %p252 = pneg %p99
        %p253 = pneg %p96
        %p254 = pneg %p120
        %p255 = pneg %p117
        %p256 = pneg %p141
        %p257 = pneg %p138
        %p258 = pneg %p162
        %p259 = pneg %p159
        %p260 = pneg %p190
        %p261 = pneg %p187
        %s262 = sand.u32 %s177, 1
        %s263 = scalar_lea.sflag [#allocation7], %s262
        %s264 = sand.u32 %s177, 1
        %s265 = smul.addr %s264, 8
        %s266 = scalar_lea.vmem [#allocation6], %s265
        %s267 = ssub.s32 1, %s24
        %s268 = smul.u32 %s25, %s267
        %p269 = scmp.lt.s32.totalorder %s268, 0
        %s270 = scalar_select %p269, %s268, 0
        %s271 = smul.addr %s270, 8
        %s272 = scalar_lea.vmem %s0, %s271
        %s273 = ssub.s32 1, %s24
        %s274 = smul.u32 %s25, %s273
        %s275 = smul.u32 %s24, %s25
        %p276 = scmp.eq.s32.totalorder %s24, 0
        %p277 = scmp.eq.s32.totalorder %s25, 0
        %p278 = pnand %p276, %p277
        %p279 = pneg %p278
        // Predicated region
        $region45: #{tpu_custom_call.1} parent=43 // pred_check
          _
        $region46: #{tpu_custom_call.1} parent=43 // pred_check_branch
          %281 = sbr.rel (%p278) target = $region48
        $region47: #{tpu_custom_call.1} parent=43 // pred_region
          %vm282 = vcmask 7168
          %283 = vst.msk [vmem:[#allocation2] sm:$0xff] %vm282, 0.0
          %284 = vst.msk [vmem:[#allocation3] sm:$0xff] %vm282, 0.0
        $region48: #{tpu_custom_call.1} parent=43 // pred_fallthru
          _
        // Predicated region
        $region49: #{tpu_custom_call.1} parent=43 // pred_check
          %p285 = pneg %p276
        $region50: #{tpu_custom_call.1} parent=43 // pred_check_branch
          %287 = sbr.rel (%p285) target = $region52
        $region51: #{tpu_custom_call.1} parent=43 // pred_region
          %v288 = vld [vmem:[%s272] sm:$0xff]
          %vm289 = vcmask 1047808
          %290 = vrot.lane.b32.xlu0 %v288, 32
          %v291 = vpop.permute.xlu0 %290
          %v292 = vsel %vm289, %v291, %v288
          %293 = vrot.lane.b32.xlu0 %v292, 32
          %v294 = vpop.permute.xlu0 %293
          %v295 = vsel %vm289, %v294, %v288
          %v296 = vld [vmem:[%s4] sm:$0x1]
          %v298 = vlaneseq
          %v299 = vshrl.u32 %v298, 7
          %v300 = vsub.s32 0, %v299
          %v301 = vrot.slane %v296, %v300
          %302 = vrot.lane.b32.xlu0 %v301, 31
          %v303 = vpop.permute.xlu0 %302
          %v305 = vmul.f32 %v295, %v303
          %307 = vrot.lane.b32.xlu0 %v305, 97
          %v308 = vpop.permute.xlu0 %307
          %vm310 = vcmask 261120
          %311 = vst.msk [vmem:[#allocation4] sm:$0xff] %vm310, %v308
          %312 = vst.msk [vmem:[#allocation4 + $0x8] sm:$0xff] %vm310, %v288
          %v313 = vld [vmem:[%s5] sm:$0x1]
          %v315 = vlaneseq
          %v316 = vshrl.u32 %v315, 7
          %v317 = vsub.s32 0, %v316
          %v318 = vrot.slane %v313, %v317
          %319 = vrot.lane.b32.xlu0 %v318, 1
          %v320 = vpop.permute.xlu0 %319
          %v322 = vmul.f32 %v295, %v320
          %324 = vrot.lane.b32.xlu0 %v322, 127
          %v325 = vpop.permute.xlu0 %324
          %327 = vst.msk [vmem:[#allocation4 + $0x10] sm:$0xff] %vm310, %v325
          %v328 = vld [vmem:[%s1] sm:$0xff]
          %v329 = vld [vmem:[#allocation4] sm:$0xff]
          %v330 = vld [vmem:[#allocation4 + $0x8] sm:$0xff]
          %v331 = vld [vmem:[#allocation4 + $0x10] sm:$0xff]
          %vm332 = vcmask 195584
          %v334 = vsel %vm332, %v328, 0
          %336 = vmatprep.subr.mxu0 0.0
          %337 = vmatpush1.msra.mxu0 %v329
          %338 = vmatprep.subr.mxu0 0.0
          %339 = vmatpush1.msra.mxu0 %v330
          %340 = vmatprep.subr.mxu0 0.0
          %341 = vmatpush1.msra.mxu0 %v331
          %342 = vmatprep.subr.mxu0 0.0
          %343 = vmatpush1.msra.mxu0 0.0
          %344 = vmatprep.subr.mxu0 0.0
          %345 = vmatpush1.msra.mxu0 0.0
          %346 = vmatprep.subr.mxu0 0.0
          %347 = vmatpush1.msra.mxu0 0.0
          %348 = vmatprep.subr.mxu0 0.0
          %349 = vmatpush1.msra.mxu0 0.0
          %350 = vmatprep.subr.mxu0 0.0
          %351 = vmatpush1.msra.mxu0 0.0
          %352 = vmatprep.subr.mxu0 0.0
          %353 = vmatpush1.msra.mxu0 0.0
          %354 = vmatprep.subr.mxu0 0.0
          %355 = vmatpush1.msra.mxu0 0.0
          %356 = vmatprep.subr.mxu0 0.0
          %357 = vmatpush1.msra.mxu0 0.0
          %358 = vmatprep.subr.mxu0 0.0
          %359 = vmatpush1.msra.mxu0 0.0
          %360 = vmatprep.subr.mxu0 0.0
          %361 = vmatpush1.msra.mxu0 0.0
          %362 = vmatprep.subr.mxu0 0.0
          %363 = vmatpush1.msra.mxu0 0.0
          %364 = vmatprep.subr.mxu0 0.0
          %365 = vmatpush1.msra.mxu0 0.0
          %366 = vmatprep.subr.mxu0 0.0
          %367 = vmatpush1.msra.mxu0 0.0
          %368 = vmatprep.subr.mxu0 0.0
          %369 = vmatpush1.msra.mxu0 0.0
          %370 = vmatprep.subr.mxu0 0.0
          %371 = vmatpush1.msra.mxu0 0.0
          %372 = vmatprep.subr.mxu0 0.0
          %373 = vmatpush1.msra.mxu0 0.0
          %374 = vmatprep.subr.mxu0 0.0
          %375 = vmatpush1.msra.mxu0 0.0
          %376 = vmatprep.subr.mxu0 0.0
          %377 = vmatpush1.msra.mxu0 0.0
          %378 = vmatprep.subr.mxu0 0.0
          %379 = vmatpush1.msra.mxu0 0.0
          %380 = vmatprep.subr.mxu0 0.0
          %381 = vmatpush1.msra.mxu0 0.0
          %382 = vmatprep.subr.mxu0 0.0
          %383 = vmatpush1.msra.mxu0 0.0
          %384 = vmatprep.subr.mxu0 0.0
          %385 = vmatpush1.msra.mxu0 0.0
          %386 = vmatprep.subr.mxu0 0.0
          %387 = vmatpush1.msra.mxu0 0.0
          %388 = vmatprep.subr.mxu0 0.0
          %389 = vmatpush1.msra.mxu0 0.0
          %390 = vmatprep.subr.mxu0 0.0
          %391 = vmatpush1.msra.mxu0 0.0
          %392 = vmatprep.subr.mxu0 0.0
          %393 = vmatpush1.msra.mxu0 0.0
          %394 = vmatprep.subr.mxu0 0.0
          %395 = vmatpush1.msra.mxu0 0.0
          %396 = vmatprep.subr.mxu0 0.0
          %397 = vmatpush1.msra.mxu0 0.0
          %398 = vmatprep.subr.mxu0 0.0
          %399 = vmatpush1.msra.mxu0 0.0
          %400 = vmatprep.mubr.f32.mxu0 0.0
          %401 = vmatmul.mubr.f32.gmra.mrb[0].mxu0 %v334
          %v402 = vpop.f32.mrb[0].mxu0
          %v403 = vadd.f32 0.0, %v402
          %v404 = vpop.f32.mrb[0].mxu0
          %405 = vdwg.mxu0
          %v406 = vld [vmem:[#allocation2] sm:$0xff]
          %v407 = vsel %vm310, %v403, 0.0
          %408 = vadd.xlane.f32.xlu0 %v407
          %v409 = vpop.xlane.xlu0 %408
          %v410 = vadd.f32 %v406, %v409
          %vm411 = vcmask 7168
          %412 = vst.msk [vmem:[#allocation2] sm:$0xff] %vm411, %v410
          %v413 = vld [vmem:[#allocation3] sm:$0xff]
          %v414 = vmul.f32 %v403, %v403
          %v415 = vsel %vm310, %v414, 0.0
          %416 = vadd.xlane.f32.xlu0 %v415
          %v417 = vpop.xlane.xlu0 %416
          %v418 = vadd.f32 %v413, %v417
          %419 = vst.msk [vmem:[#allocation3] sm:$0xff] %vm411, %v418
          %420 = vst.msk [vmem:[#allocation5] sm:$0xff] %vm310, %v403
        $region52: #{tpu_custom_call.1} parent=43 // pred_fallthru
          _
        %p421 = scmp.eq.s32.totalorder %s24, 1
        // Predicated region
        $region53: #{tpu_custom_call.1} parent=43 // pred_check
          %p422 = pneg %p421
        $region54: #{tpu_custom_call.1} parent=43 // pred_check_branch
          %424 = sbr.rel (%p422) target = $region56
        $region55: #{tpu_custom_call.1} parent=43 // pred_region
          %v425 = vld [vmem:[#allocation5] sm:$0xff]
          %v426 = vld [vmem:[#allocation2] sm:$0xff]
          %v427 = vmul.f32 %v426, 0.03125
          %v428 = vld [vmem:[#allocation3] sm:$0xff]
          %v429 = vmul.f32 %v428, 0.03125
          %v430 = vmul.f32 %v427, %v427
          %v431 = vsub.f32 %v429, %v430
          %v432 = vmax.f32 %v431, 0.0
          %v433 = vld [vmem:[%s2] sm:$0xff]
          %v434 = vadd.f32 %v432, 1e-05
          %v435 = vrsqrt.pop %v434
          %v436 = vmul.f32 %v433, %v435
          %v437 = vld [vmem:[%s3] sm:$0xff]
          %v438 = vmul.f32 %v427, %v436
          %v439 = vsub.f32 %v437, %v438
          %441 = vset.pattern.permute.xlu0 0
          %442 = vperm.xlu0 %441, %v436
          %v443 = vpop.permute.xlu0 %442
          %v445 = vmul.f32 %v425, %v443
          %447 = vset.pattern.permute.xlu0 0
          %448 = vperm.xlu0 %447, %v439
          %v449 = vpop.permute.xlu0 %448
          %v451 = vadd.f32 %v445, %v449
          %v452 = vmax.f32 %v451, 0.0
          %vm453 = vcmask 261120
          %454 = vst.msk [vmem:[%s266] sm:$0xff] %vm453, %v452
        $region56: #{tpu_custom_call.1} parent=43 // pred_fallthru
          _
        %s455 = sand.u32 %s177, 1
        %s456 = scalar_lea.sflag [#allocation7], %s455
        %s457 = sand.u32 %s177, 1
        %s458 = smul.addr %s457, 8
        %s459 = scalar_lea.vmem [#allocation6], %s458
        // Predicated region
        $region57: #{tpu_custom_call.1} parent=43 // pred_check
          %p460 = pneg %p187
        $region58: #{tpu_custom_call.1} parent=43 // pred_check_branch
          %462 = sbr.rel (%p460) target = $region60
        $region59: #{tpu_custom_call.1} parent=43 // pred_region
          %s463 = smul.u32 %s24, %s25
          %s465 = ssub.s32 128, 128
          %466 = vsyncadd %s456, %s465
          %s467 = smul.addr %s463, 128
          %s468 = scalar_lea.hbm %s6, %s467
          %s470 = sshll.u32 %s459, 4
          %s471 = int_to_ptr.vmem [resolvable:$true] %s470
          %473 = dma.vmem_to_hbm [thread:$0]  %s471, 128, %s468, %s456
        $region60: #{tpu_custom_call.1} parent=43 // pred_fallthru
          _
      $region44: #{tpu_custom_call.1} parent=5 // pred_fallthru
        _
      %p474 = scmp.le.s32.totalorder 2, %s15
      // Predicated region
      $region61: #{tpu_custom_call.1} parent=5 // pred_check
        %p475 = pneg %p474
      $region62: #{tpu_custom_call.1} parent=5 // pred_check_branch
        %477 = sbr.rel (%p475) target = $region64
      $region63: #{tpu_custom_call.1} parent=5 // pred_region
        %s478 = ssub.s32 %s15, 2
        // Predicated region
        $region65: #{tpu_custom_call.1} parent=63 // pred_check
          %p479 = pneg %p193
        $region66: #{tpu_custom_call.1} parent=63 // pred_check_branch
          %481 = sbr.rel (%p479) target = $region68
        $region67: #{tpu_custom_call.1} parent=63 // pred_region
          %s482 = sand.u32 %s178, 1
          %s483 = scalar_lea.sflag [#allocation7], %s482
          %s484 = sand.u32 %s178, 1
          %s485 = smul.addr %s484, 8
          %s486 = scalar_lea.vmem [#allocation6], %s485
          %487 = dma.done %s483, 128
        $region68: #{tpu_custom_call.1} parent=63 // pred_fallthru
          _
      $region64: #{tpu_custom_call.1} parent=5 // pred_fallthru
        _
    $region6: #{tpu_custom_call.1} parent=1 // loop_footer
      %s19 = sadd.s32 1, %s15
    $region7: #{tpu_custom_call.1} parent=1 // loop_footer_branch
      %14 = sbr.rel target = $region3
    $region8: #{tpu_custom_call.1} parent=1 // loop_exit
      _
    %488 = vsyncpa [#allocation7], 1
    %s489 = scalar_lea.sflag [#allocation7], 1
    %490 = vsyncpa %s489, 1

</llo_original>
